<compile_context>
chip_gen: v6e
topology: v6e:2x2x1
jax: 0.10.0
libtpu: 0.0.40
codegen_flags: <defaults>
</compile_context>

<pallas_src>
from functools import partial

import jax
import jax.numpy as jnp
from jax import lax
from jax.experimental import pallas as pl
from jax.experimental.pallas import tpu as pltpu


def _round_up(n, m):
    return ((n + m - 1) // m) * m


def _server_kernel(x_ref, w1_ref, w2_ref, bias_ref, o_ref):
    # x_ref   : (Bt, D)   f32   (cast to bf16 in-kernel)
    # w1_ref  : (D,  Hp)  bf16  (pre-transposed, H zero-padded to Hp)
    # w2_ref  : (Hp, Cp)  bf16  (pre-transposed, classes zero-padded to Cp)
    # bias_ref: (2,  Lp)  f32   row 0 = b1 (padded), row 1 = b2 (padded)
    # o_ref   : (Bt, Cp)  f32
    hp = w1_ref.shape[1]
    cp = w2_ref.shape[1]

    x = x_ref[...].astype(jnp.bfloat16)
    h = lax.dot_general(
        x, w1_ref[...],
        dimension_numbers=(((1,), (0,)), ((), ())),
        preferred_element_type=jnp.float32,
    )
    h = jnp.maximum(h + bias_ref[0:1, :hp], 0.0)          # bias + ReLU in f32
    o = lax.dot_general(
        h.astype(jnp.bfloat16), w2_ref[...],
        dimension_numbers=(((1,), (0,)), ((), ())),
        preferred_element_type=jnp.float32,
    )
    o_ref[...] = o + bias_ref[1:2, :cp]


def prepare_server_params(w1, b1, w2, b2):
    """One-time (model-load) prep of the static server weights.

    w1: (hidden, D)   PyTorch Linear layout (out, in)
    b1: (hidden,)
    w2: (classes, hidden)
    b2: (classes,)

    Returns (w1t, w2t, bias):
        w1t : (D, Hp)   bf16, Hp = round_up(hidden, 128), zero-padded
        w2t : (Hp, Cp)  bf16, Cp = round_up(classes, 128), zero-padded
        bias: (2, Lp)   f32,  Lp = max(Hp, Cp); row0=b1 pad, row1=b2 pad
    """
    H, D = w1.shape
    C, H2 = w2.shape
    assert H2 == H
    Hp = _round_up(H, 128)
    Cp = _round_up(C, 128)
    Lp = max(Hp, Cp)

    w1t = jnp.pad(w1.astype(jnp.float32), ((0, Hp - H), (0, 0))).T.astype(jnp.bfloat16)
    w2t = jnp.pad(
        w2.astype(jnp.float32), ((0, Cp - C), (0, Hp - H))
    ).T.astype(jnp.bfloat16)
    b1p = jnp.pad(b1.astype(jnp.float32), (0, Lp - H))
    b2p = jnp.pad(b2.astype(jnp.float32), (0, Lp - C))
    bias = jnp.stack([b1p, b2p], axis=0)                   # (2, Lp)
    return w1t, w2t, bias


@partial(jax.jit, static_argnames=("num_classes", "batch_tile"))
def server_model_forward(x_nchw, w1t, w2t, bias, *, num_classes, batch_tile=512):
    """Split-learning server forward: Flatten -> Linear -> ReLU -> Linear.

    x_nchw : (B, C, H, W) float32 client cut activation (NCHW like PyTorch)
    w1t/w2t/bias : output of prepare_server_params (static, pre-padded/cast)
    """
    B = x_nchw.shape[0]
    D = x_nchw.shape[1] * x_nchw.shape[2] * x_nchw.shape[3]
    Hp = w1t.shape[1]
    Cp = w2t.shape[1]
    Lp = bias.shape[1]
    assert w1t.shape[0] == D

    x2d = x_nchw.reshape(B, D).astype(jnp.float32)

    if B <= batch_tile:
        # Single-step grid; block uses the full (B, D) extent -> no batch pad.
        Bt, Bp = B, B
        x_in = x2d
    else:
        Bt = batch_tile                      # multiple of 8
        Bp = _round_up(B, Bt)
        x_in = jnp.pad(x2d, ((0, Bp - B), (0, 0))) if Bp != B else x2d

    grid = (Bp // Bt,)

    flops = 2 * Bp * (D * Hp + Hp * Cp)
    bytes_accessed = (
        Bp * D * 4          # x (f32 in)
        + D * Hp * 2        # W1 (bf16)
        + Hp * Cp * 2       # W2 (bf16)
        + 2 * Lp * 4        # biases
        + Bp * Cp * 4       # output (f32)
    )

    out_padded = pl.pallas_call(
        _server_kernel,
        out_shape=jax.ShapeDtypeStruct((Bp, Cp), jnp.float32),
        grid=grid,
        in_specs=[
            pl.BlockSpec((Bt, D), lambda i: (i, 0)),    # x: tiled on batch
            pl.BlockSpec((D, Hp), lambda i: (0, 0)),    # W1: VMEM-resident
            pl.BlockSpec((Hp, Cp), lambda i: (0, 0)),   # W2: VMEM-resident
            pl.BlockSpec((2, Lp), lambda i: (0, 0)),    # biases: resident
        ],
        out_specs=pl.BlockSpec((Bt, Cp), lambda i: (i, 0)),
        compiler_params=pltpu.CompilerParams(
            dimension_semantics=("parallel",),          # second TC on v7x
        ),
        cost_estimate=pl.CostEstimate(
            flops=flops, transcendentals=0, bytes_accessed=bytes_accessed
        ),
    )(x_in, w1t, w2t, bias)

    return out_padded[:B, :num_classes]


def _reference_forward(x_nchw, w1, b1, w2, b2):
    B = x_nchw.shape[0]
    x2d = x_nchw.reshape(B, -1)
    h = jnp.maximum(x2d @ w1.T + b1, 0.0)
    return h @ w2.T + b2


if __name__ == "__main__":
    key = jax.random.PRNGKey(0)
    k_x, k_w1, k_b1, k_w2, k_b2, k_xb = jax.random.split(key, 6)

    B, C_in, HH, WW = 2, 4, 16, 16       # client cut activation shape (NCHW)
    D = C_in * HH * WW                   # 1024
    HID = 32                             # hidden width of server Linear 1
    NCLS = 10                            # classes

    # Deterministic synthetic parameters (PyTorch Linear layout: (out, in)).
    x = jax.random.normal(k_x, (B, C_in, HH, WW), dtype=jnp.float32)
    w1 = jax.random.normal(k_w1, (HID, D), dtype=jnp.float32) * 0.02
    b1 = jax.random.normal(k_b1, (HID,), dtype=jnp.float32) * 0.02
    w2 = jax.random.normal(k_w2, (NCLS, HID), dtype=jnp.float32) * 0.02
    b2 = jax.random.normal(k_b2, (NCLS,), dtype=jnp.float32) * 0.02

    # One-time weight prep (model-load time), reused across calls.
    w1t, w2t, bias = prepare_server_params(w1, b1, w2, b2)
    w1t, w2t, bias = jax.block_until_ready((w1t, w2t, bias))

    # --- Small-batch path (grid of 1, full-extent block, no batch pad). ---
    out = server_model_forward(x, w1t, w2t, bias, num_classes=NCLS)
    out = jax.block_until_ready(out)
    ref = _reference_forward(x, w1, b1, w2, b2)
    assert out.shape == (B, NCLS)
    # bf16 matmul operands (f32 accumulation) vs f32 reference -> loosened tol.
    assert jnp.allclose(out, ref, atol=2e-2, rtol=2e-2), "mismatch vs JAX reference"

    # --- Batched path (grid > 1, weights stay VMEM-resident across steps). ---
    Bb = 16
    xb = jax.random.normal(k_xb, (Bb, C_in, HH, WW), dtype=jnp.float32)
    out_b = server_model_forward(xb, w1t, w2t, bias, num_classes=NCLS, batch_tile=8)
    out_b = jax.block_until_ready(out_b)
    ref_b = _reference_forward(xb, w1, b1, w2, b2)
    assert out_b.shape == (Bb, NCLS)
    assert jnp.allclose(out_b, ref_b, atol=2e-2, rtol=2e-2), "batched mismatch"

    print("KERNEL_OK")
</pallas_src>

<mosaic_0001>
module attributes {stable_mosaic.version = 11 : i64} {
  func.func @_server_kernel(%arg0: i32, %arg1: memref<2x1024xf32, #tpu.memory_space<vmem>>, %arg2: memref<1024x128xbf16, #tpu.memory_space<vmem>>, %arg3: memref<128x128xbf16, #tpu.memory_space<vmem>>, %arg4: memref<2x128xf32, #tpu.memory_space<vmem>>, %arg5: memref<2x128xf32, #tpu.memory_space<vmem>>) attributes {dimension_semantics = [#tpu.dimension_semantics<parallel>], iteration_bounds = array<i64: 1>, scalar_prefetch = 0 : i64, scratch_operands = 0 : i64, tpu.core_type = #tpu.core_type<tc>, window_params = [{transform_indices = @transform_0, window_bounds = array<i64: 2, 1024>}, {pipeline_mode = #tpu.pipeline_mode<synchronous>, transform_indices = @transform_1, window_bounds = array<i64: 1024, 128>}, {pipeline_mode = #tpu.pipeline_mode<synchronous>, transform_indices = @transform_2, window_bounds = array<i64: 128, 128>}, {pipeline_mode = #tpu.pipeline_mode<synchronous>, transform_indices = @transform_3, window_bounds = array<i64: 2, 128>}, {transform_indices = @transform_4, window_bounds = array<i64: 2, 128>}]} {
    %c0 = arith.constant 0 : index
    %c0_0 = arith.constant 0 : index
    %0 = vector.load %arg1[%c0, %c0_0] : memref<2x1024xf32, #tpu.memory_space<vmem>>, vector<2x1024xf32>
    %1 = arith.truncf %0 : vector<2x1024xf32> to vector<2x1024xbf16>
    %c0_1 = arith.constant 0 : index
    %c0_2 = arith.constant 0 : index
    %2 = vector.load %arg2[%c0_1, %c0_2] : memref<1024x128xbf16, #tpu.memory_space<vmem>>, vector<1024x128xbf16>
    %cst = arith.constant dense<0.000000e+00> : vector<2x128xf32>
    %3 = tpu.matmul %1, %2, %cst {dimension_numbers = #tpu.dot_dimension_numbers<[1], [0], [0], [1], [0, 0, 1, 1], [], []>} : vector<2x1024xbf16>, vector<1024x128xbf16>, vector<2x128xf32> -> vector<2x128xf32>
    %c0_3 = arith.constant 0 : index
    %c0_4 = arith.constant 0 : index
    %4 = vector.load %arg4[%c0_3, %c0_4] : memref<2x128xf32, #tpu.memory_space<vmem>>, vector<1x128xf32>
    %5 = vector.broadcast %4 : vector<1x128xf32> to vector<2x128xf32>
    %6 = arith.addf %3, %5 : vector<2x128xf32>
    %cst_5 = arith.constant 0.000000e+00 : f32
    %7 = vector.broadcast %cst_5 : f32 to vector<2x128xf32>
    %8 = arith.maximumf %6, %7 : vector<2x128xf32>
    %9 = arith.truncf %8 : vector<2x128xf32> to vector<2x128xbf16>
    %c0_6 = arith.constant 0 : index
    %c0_7 = arith.constant 0 : index
    %10 = vector.load %arg3[%c0_6, %c0_7] : memref<128x128xbf16, #tpu.memory_space<vmem>>, vector<128x128xbf16>
    %cst_8 = arith.constant dense<0.000000e+00> : vector<2x128xf32>
    %11 = tpu.matmul %9, %10, %cst_8 {dimension_numbers = #tpu.dot_dimension_numbers<[1], [0], [0], [1], [0, 0, 1, 1], [], []>} : vector<2x128xbf16>, vector<128x128xbf16>, vector<2x128xf32> -> vector<2x128xf32>
    %c1 = arith.constant 1 : index
    %c0_9 = arith.constant 0 : index
    %12 = vector.load %arg4[%c1, %c0_9] : memref<2x128xf32, #tpu.memory_space<vmem>>, vector<1x128xf32>
    %13 = vector.broadcast %12 : vector<1x128xf32> to vector<2x128xf32>
    %14 = arith.addf %11, %13 : vector<2x128xf32>
    %c0_10 = arith.constant 0 : index
    %c0_11 = arith.constant 0 : index
    %15 = vector.load %arg5[%c0_10, %c0_11] : memref<2x128xf32, #tpu.memory_space<vmem>>, vector<2x128xf32>
    tpu.vector_store %arg5[%c0_10, %c0_11], %14 {strides = array<i32>} : memref<2x128xf32, #tpu.memory_space<vmem>>, vector<2x128xf32>,
    return
  }
  func.func @transform_0(%arg0: i32) -> (i32, i32) {
    %c0_i32 = arith.constant 0 : i32
    %c0_i32_0 = arith.constant 0 : i32
    return %arg0, %c0_i32 : i32, i32
  }
  func.func @transform_1(%arg0: i32) -> (i32, i32) {
    %c0_i32 = arith.constant 0 : i32
    %c0_i32_0 = arith.constant 0 : i32
    %c0_i32_1 = arith.constant 0 : i32
    return %c0_i32, %c0_i32_0 : i32, i32
  }
  func.func @transform_2(%arg0: i32) -> (i32, i32) {
    %c0_i32 = arith.constant 0 : i32
    %c0_i32_0 = arith.constant 0 : i32
    %c0_i32_1 = arith.constant 0 : i32
    return %c0_i32, %c0_i32_0 : i32, i32
  }
  func.func @transform_3(%arg0: i32) -> (i32, i32) {
    %c0_i32 = arith.constant 0 : i32
    %c0_i32_0 = arith.constant 0 : i32
    %c0_i32_1 = arith.constant 0 : i32
    return %c0_i32, %c0_i32_0 : i32, i32
  }
  func.func @transform_4(%arg0: i32) -> (i32, i32) {
    %c0_i32 = arith.constant 0 : i32
    %c0_i32_0 = arith.constant 0 : i32
    return %arg0, %c0_i32 : i32, i32
  }
}

</mosaic_0001>

<llo_original>
// kernel: server_model_forward.1
$region0: #{server_model_forward.1}
  #allocation0 [shape = 'u32[]', space=smem, size = 0x4, offset = 0x4, fixed_abs, tag = 'smem constant byte address 0x4 - core index']
  #allocation1 [shape = 'u32[144,128]{1,0:T(1,128)}', space=vmem, size = 0x12000, scoped, tag = 'internal scratch']
  %s0 = inlined_call_operand.vmem [shape: f32[2,1024], index: 0, kind: input, shape index: {}]
  %s1 = inlined_call_operand.hbm [shape: bf16[1024,128], index: 1, kind: input, shape index: {}]
  %s2 = inlined_call_operand.vmem [shape: bf16[128,128], index: 2, kind: input, shape index: {}]
  %s3 = inlined_call_operand.vmem [shape: f32[2,128], index: 3, kind: input, shape index: {}]
  %s4 = inlined_call_operand.hbm [shape: f32[2,128], index: 4, kind: output, shape index: {}]
  %s5 = sld [smem:[#allocation0]]
  $region30: #{server_model_forward.1} parent=0
    _
  %s7 = ssub.s32 1, %s5
  %s8 = scalar_select 0, %s7, %s5
  $region1: #{server_model_forward.1} parent=0
    #allocation2 [shape = 'u8[262144]{0}', space=vmem, size = 0x40000, scoped, tag = 'input window, operand 1, single buffered']
    #allocation3 [shape = 's32[1]{0}', space=sflag, size = 0x4, scoped, tag = 'scoped memory for server_model_forward.1']
    #allocation4 [shape = 's32[1]{0}', space=sflag, size = 0x4, scoped, tag = 'scoped memory for server_model_forward.1']
    #allocation5 [shape = 'u8[1024]{0}', space=vmem, size = 0x400, scoped, tag = 'output window, operand 0, single buffered']
    %9 = vsyncpa [#allocation3], 0
    %10 = vsyncpa [#allocation4], 0
    // Predicated region
    $region2: #{server_model_forward.1} parent=1 // pred_check
      _
    $region3: #{server_model_forward.1} parent=1 // pred_check_branch
      %12 = sbr.rel (0) target = $region5
    $region4: #{server_model_forward.1} parent=1 // pred_region
      _
    $region5: #{server_model_forward.1} parent=1 // pred_fallthru
      _
    // Predicated region
    $region6: #{server_model_forward.1} parent=1 // pred_check
      _
    $region7: #{server_model_forward.1} parent=1 // pred_check_branch
      %14 = sbr.rel (0) target = $region9
    $region8: #{server_model_forward.1} parent=1 // pred_region
      %s16 = ssub.s32 8192, 8192
      %17 = vsyncadd [#allocation3], %s16
      %s18 = sshll.u32 [#allocation2], 4
      %s19 = int_to_ptr.vmem [resolvable:$true] %s18
      %24 = dma.hbm_to_vmem [thread:$0]  %s1, 8192, %s19, [#allocation3], 64, 64, 4
    $region9: #{server_model_forward.1} parent=1 // pred_fallthru
      _
    // Predicated region
    $region10: #{server_model_forward.1} parent=1 // pred_check
      _
    $region11: #{server_model_forward.1} parent=1 // pred_check_branch
      %26 = sbr.rel (0) target = $region13
    $region12: #{server_model_forward.1} parent=1 // pred_region
      _
    $region13: #{server_model_forward.1} parent=1 // pred_fallthru
      _
    // Predicated region
    $region14: #{server_model_forward.1} parent=1 // pred_check
      _
    $region15: #{server_model_forward.1} parent=1 // pred_check_branch
      %28 = sbr.rel (0) target = $region17
    $region16: #{server_model_forward.1} parent=1 // pred_region
      _
    $region17: #{server_model_forward.1} parent=1 // pred_fallthru
      _
    // Predicated region
    $region18: #{server_model_forward.1} parent=1 // pred_check
      _
    $region19: #{server_model_forward.1} parent=1 // pred_check_branch
      %30 = sbr.rel (0) target = $region21
    $region20: #{server_model_forward.1} parent=1 // pred_region
      %31 = dma.done [#allocation3], 8192
    $region21: #{server_model_forward.1} parent=1 // pred_fallthru
      _
    %v33 = vld [vmem:[%s0] sm:$0xff]
    %v34 = vld [vmem:[%s0 + $0x8] sm:$0xff]
    %v37 = vcombine.high %v33, %v33
    %v39 = vunpack.c.l.s4 1983009808
    %v40 = vunpack.c.0.s8 %v39
    %v41 = vlaneseq
    %v42 = vshrl.u32 %v41, 7
    %v43 = vsub.s32 %v40, %v42
    %v44 = vrot.slane %v33, %v43
    %v46 = vunpack.c.l.s4 1983009808
    %v47 = vunpack.c.0.s8 %v46
    %v48 = vlaneseq
    %v49 = vshrl.u32 %v48, 7
    %v50 = vsub.s32 %v47, %v49
    %v51 = vrot.slane %v37, %v50
    %v52 = vcombine.high %v44, %v44
    %v53 = vcombine.high %v51, %v51
    %v54 = vcombine.high %v34, %v34
    %v56 = vunpack.c.l.s4 1983009808
    %v57 = vunpack.c.0.s8 %v56
    %v58 = vlaneseq
    %v59 = vshrl.u32 %v58, 7
    %v60 = vsub.s32 %v57, %v59
    %v61 = vrot.slane %v34, %v60
    %v63 = vunpack.c.l.s4 1983009808
    %v64 = vunpack.c.0.s8 %v63
    %v65 = vlaneseq
    %v66 = vshrl.u32 %v65, 7
    %v67 = vsub.s32 %v64, %v66
    %v68 = vrot.slane %v54, %v67
    %v69 = vcombine.high %v61, %v61
    %v70 = vcombine.high %v68, %v68
    %v79 = vpack.c.bf16 %v44, %v44
    %v80 = vpack.c.bf16 %v52, %v52
    %v81 = vpack.c.bf16 %v51, %v51
    %v82 = vpack.c.bf16 %v53, %v53
    %v83 = vpack.c.bf16 %v61, %v61
    %v84 = vpack.c.bf16 %v69, %v69
    %v85 = vpack.c.bf16 %v68, %v68
    %v86 = vpack.c.bf16 %v70, %v70
    %v87 = vld [vmem:[#allocation2] sm:$0xf]
    %v88 = vld [vmem:[#allocation2 + $0x4] sm:$0xf]
    %v89 = vld [vmem:[#allocation2 + $0x8] sm:$0xf]
    %v90 = vld [vmem:[#allocation2 + $0xc] sm:$0xf]
    %v91 = vld [vmem:[#allocation2 + $0x10] sm:$0xf]
    %v92 = vld [vmem:[#allocation2 + $0x14] sm:$0xf]
    %v93 = vld [vmem:[#allocation2 + $0x18] sm:$0xf]
    %v94 = vld [vmem:[#allocation2 + $0x1c] sm:$0xf]
    %v95 = vld [vmem:[#allocation2 + $0x20] sm:$0xf]
    %v96 = vld [vmem:[#allocation2 + $0x24] sm:$0xf]
    %v97 = vld [vmem:[#allocation2 + $0x28] sm:$0xf]
    %v98 = vld [vmem:[#allocation2 + $0x2c] sm:$0xf]
    %v99 = vld [vmem:[#allocation2 + $0x30] sm:$0xf]
    %v100 = vld [vmem:[#allocation2 + $0x34] sm:$0xf]
    %v101 = vld [vmem:[#allocation2 + $0x38] sm:$0xf]
    %v102 = vld [vmem:[#allocation2 + $0x3c] sm:$0xf]
    %v103 = vld [vmem:[#allocation2 + $0x40] sm:$0xf]
    %v104 = vld [vmem:[#allocation2 + $0x44] sm:$0xf]
    %v105 = vld [vmem:[#allocation2 + $0x48] sm:$0xf]
    %v106 = vld [vmem:[#allocation2 + $0x4c] sm:$0xf]
    %v107 = vld [vmem:[#allocation2 + $0x50] sm:$0xf]
    %v108 = vld [vmem:[#allocation2 + $0x54] sm:$0xf]
    %v109 = vld [vmem:[#allocation2 + $0x58] sm:$0xf]
    %v110 = vld [vmem:[#allocation2 + $0x5c] sm:$0xf]
    %v111 = vld [vmem:[#allocation2 + $0x60] sm:$0xf]
    %v112 = vld [vmem:[#allocation2 + $0x64] sm:$0xf]
    %v113 = vld [vmem:[#allocation2 + $0x68] sm:$0xf]
    %v114 = vld [vmem:[#allocation2 + $0x6c] sm:$0xf]
    %v115 = vld [vmem:[#allocation2 + $0x70] sm:$0xf]
    %v116 = vld [vmem:[#allocation2 + $0x74] sm:$0xf]
    %v117 = vld [vmem:[#allocation2 + $0x78] sm:$0xf]
    %v118 = vld [vmem:[#allocation2 + $0x7c] sm:$0xf]
    %v119 = vld [vmem:[#allocation2 + $0x80] sm:$0xf]
    %v120 = vld [vmem:[#allocation2 + $0x84] sm:$0xf]
    %v121 = vld [vmem:[#allocation2 + $0x88] sm:$0xf]
    %v122 = vld [vmem:[#allocation2 + $0x8c] sm:$0xf]
    %v123 = vld [vmem:[#allocation2 + $0x90] sm:$0xf]
    %v124 = vld [vmem:[#allocation2 + $0x94] sm:$0xf]
    %v125 = vld [vmem:[#allocation2 + $0x98] sm:$0xf]
    %v126 = vld [vmem:[#allocation2 + $0x9c] sm:$0xf]
    %v127 = vld [vmem:[#allocation2 + $0xa0] sm:$0xf]
    %v128 = vld [vmem:[#allocation2 + $0xa4] sm:$0xf]
    %v129 = vld [vmem:[#allocation2 + $0xa8] sm:$0xf]
    %v130 = vld [vmem:[#allocation2 + $0xac] sm:$0xf]
    %v131 = vld [vmem:[#allocation2 + $0xb0] sm:$0xf]
    %v132 = vld [vmem:[#allocation2 + $0xb4] sm:$0xf]
    %v133 = vld [vmem:[#allocation2 + $0xb8] sm:$0xf]
    %v134 = vld [vmem:[#allocation2 + $0xbc] sm:$0xf]
    %v135 = vld [vmem:[#allocation2 + $0xc0] sm:$0xf]
    %v136 = vld [vmem:[#allocation2 + $0xc4] sm:$0xf]
    %v137 = vld [vmem:[#allocation2 + $0xc8] sm:$0xf]
    %v138 = vld [vmem:[#allocation2 + $0xcc] sm:$0xf]
    %v139 = vld [vmem:[#allocation2 + $0xd0] sm:$0xf]
    %v140 = vld [vmem:[#allocation2 + $0xd4] sm:$0xf]
    %v141 = vld [vmem:[#allocation2 + $0xd8] sm:$0xf]
    %v142 = vld [vmem:[#allocation2 + $0xdc] sm:$0xf]
    %v143 = vld [vmem:[#allocation2 + $0xe0] sm:$0xf]
    %v144 = vld [vmem:[#allocation2 + $0xe4] sm:$0xf]
    %v145 = vld [vmem:[#allocation2 + $0xe8] sm:$0xf]
    %v146 = vld [vmem:[#allocation2 + $0xec] sm:$0xf]
    %v147 = vld [vmem:[#allocation2 + $0xf0] sm:$0xf]
    %v148 = vld [vmem:[#allocation2 + $0xf4] sm:$0xf]
    %v149 = vld [vmem:[#allocation2 + $0xf8] sm:$0xf]
    %v150 = vld [vmem:[#allocation2 + $0xfc] sm:$0xf]
    %v151 = vld [vmem:[#allocation2 + $0x100] sm:$0xf]
    %v152 = vld [vmem:[#allocation2 + $0x104] sm:$0xf]
    %v153 = vld [vmem:[#allocation2 + $0x108] sm:$0xf]
    %v154 = vld [vmem:[#allocation2 + $0x10c] sm:$0xf]
    %v155 = vld [vmem:[#allocation2 + $0x110] sm:$0xf]
    %v156 = vld [vmem:[#allocation2 + $0x114] sm:$0xf]
    %v157 = vld [vmem:[#allocation2 + $0x118] sm:$0xf]
    %v158 = vld [vmem:[#allocation2 + $0x11c] sm:$0xf]
    %v159 = vld [vmem:[#allocation2 + $0x120] sm:$0xf]
    %v160 = vld [vmem:[#allocation2 + $0x124] sm:$0xf]
    %v161 = vld [vmem:[#allocation2 + $0x128] sm:$0xf]
    %v162 = vld [vmem:[#allocation2 + $0x12c] sm:$0xf]
    %v163 = vld [vmem:[#allocation2 + $0x130] sm:$0xf]
    %v164 = vld [vmem:[#allocation2 + $0x134] sm:$0xf]
    %v165 = vld [vmem:[#allocation2 + $0x138] sm:$0xf]
    %v166 = vld [vmem:[#allocation2 + $0x13c] sm:$0xf]
    %v167 = vld [vmem:[#allocation2 + $0x140] sm:$0xf]
    %v168 = vld [vmem:[#allocation2 + $0x144] sm:$0xf]
    %v169 = vld [vmem:[#allocation2 + $0x148] sm:$0xf]
    %v170 = vld [vmem:[#allocation2 + $0x14c] sm:$0xf]
    %v171 = vld [vmem:[#allocation2 + $0x150] sm:$0xf]
    %v172 = vld [vmem:[#allocation2 + $0x154] sm:$0xf]
    %v173 = vld [vmem:[#allocation2 + $0x158] sm:$0xf]
    %v174 = vld [vmem:[#allocation2 + $0x15c] sm:$0xf]
    %v175 = vld [vmem:[#allocation2 + $0x160] sm:$0xf]
    %v176 = vld [vmem:[#allocation2 + $0x164] sm:$0xf]
    %v177 = vld [vmem:[#allocation2 + $0x168] sm:$0xf]
    %v178 = vld [vmem:[#allocation2 + $0x16c] sm:$0xf]
    %v179 = vld [vmem:[#allocation2 + $0x170] sm:$0xf]
    %v180 = vld [vmem:[#allocation2 + $0x174] sm:$0xf]
    %v181 = vld [vmem:[#allocation2 + $0x178] sm:$0xf]
    %v182 = vld [vmem:[#allocation2 + $0x17c] sm:$0xf]
    %v183 = vld [vmem:[#allocation2 + $0x180] sm:$0xf]
    %v184 = vld [vmem:[#allocation2 + $0x184] sm:$0xf]
    %v185 = vld [vmem:[#allocation2 + $0x188] sm:$0xf]
    %v186 = vld [vmem:[#allocation2 + $0x18c] sm:$0xf]
    %v187 = vld [vmem:[#allocation2 + $0x190] sm:$0xf]
    %v188 = vld [vmem:[#allocation2 + $0x194] sm:$0xf]
    %v189 = vld [vmem:[#allocation2 + $0x198] sm:$0xf]
    %v190 = vld [vmem:[#allocation2 + $0x19c] sm:$0xf]
    %v191 = vld [vmem:[#allocation2 + $0x1a0] sm:$0xf]
    %v192 = vld [vmem:[#allocation2 + $0x1a4] sm:$0xf]
    %v193 = vld [vmem:[#allocation2 + $0x1a8] sm:$0xf]
    %v194 = vld [vmem:[#allocation2 + $0x1ac] sm:$0xf]
    %v195 = vld [vmem:[#allocation2 + $0x1b0] sm:$0xf]
    %v196 = vld [vmem:[#allocation2 + $0x1b4] sm:$0xf]
    %v197 = vld [vmem:[#allocation2 + $0x1b8] sm:$0xf]
    %v198 = vld [vmem:[#allocation2 + $0x1bc] sm:$0xf]
    %v199 = vld [vmem:[#allocation2 + $0x1c0] sm:$0xf]
    %v200 = vld [vmem:[#allocation2 + $0x1c4] sm:$0xf]
    %v201 = vld [vmem:[#allocation2 + $0x1c8] sm:$0xf]
    %v202 = vld [vmem:[#allocation2 + $0x1cc] sm:$0xf]
    %v203 = vld [vmem:[#allocation2 + $0x1d0] sm:$0xf]
    %v204 = vld [vmem:[#allocation2 + $0x1d4] sm:$0xf]
    %v205 = vld [vmem:[#allocation2 + $0x1d8] sm:$0xf]
    %v206 = vld [vmem:[#allocation2 + $0x1dc] sm:$0xf]
    %v207 = vld [vmem:[#allocation2 + $0x1e0] sm:$0xf]
    %v208 = vld [vmem:[#allocation2 + $0x1e4] sm:$0xf]
    %v209 = vld [vmem:[#allocation2 + $0x1e8] sm:$0xf]
    %v210 = vld [vmem:[#allocation2 + $0x1ec] sm:$0xf]
    %v211 = vld [vmem:[#allocation2 + $0x1f0] sm:$0xf]
    %v212 = vld [vmem:[#allocation2 + $0x1f4] sm:$0xf]
    %v213 = vld [vmem:[#allocation2 + $0x1f8] sm:$0xf]
    %v214 = vld [vmem:[#allocation2 + $0x1fc] sm:$0xf]
    %v215 = vld [vmem:[%s3] sm:$0x1]
    %v216 = vlaneseq
    %v217 = vshrl.u32 %v216, 7
    %v218 = vsub.s32 0, %v217
    %v219 = vrot.slane %v215, %v218
    %v348 = vunpack.c.l.b16 %v87
    %v349 = vunpack.c.l.b16 %v88
    %v350 = vunpack.c.l.b16 %v89
    %v351 = vunpack.c.l.b16 %v90
    %v352 = vunpack.c.l.b16 %v91
    %v353 = vunpack.c.l.b16 %v92
    %v354 = vunpack.c.l.b16 %v93
    %v355 = vunpack.c.l.b16 %v94
    %v356 = vunpack.c.l.b16 %v95
    %v357 = vunpack.c.l.b16 %v96
    %v358 = vunpack.c.l.b16 %v97
    %v359 = vunpack.c.l.b16 %v98
    %v360 = vunpack.c.l.b16 %v99
    %v361 = vunpack.c.l.b16 %v100
    %v362 = vunpack.c.l.b16 %v101
    %v363 = vunpack.c.l.b16 %v102
    %v364 = vunpack.c.l.b16 %v103
    %v365 = vunpack.c.l.b16 %v104
    %v366 = vunpack.c.l.b16 %v105
    %v367 = vunpack.c.l.b16 %v106
    %v368 = vunpack.c.l.b16 %v107
    %v369 = vunpack.c.l.b16 %v108
    %v370 = vunpack.c.l.b16 %v109
    %v371 = vunpack.c.l.b16 %v110
    %v372 = vunpack.c.l.b16 %v111
    %v373 = vunpack.c.l.b16 %v112
    %v374 = vunpack.c.l.b16 %v113
    %v375 = vunpack.c.l.b16 %v114
    %v376 = vunpack.c.l.b16 %v115
    %v377 = vunpack.c.l.b16 %v116
    %v378 = vunpack.c.l.b16 %v117
    %v379 = vunpack.c.l.b16 %v118
    %v380 = vunpack.c.l.b16 %v119
    %v381 = vunpack.c.l.b16 %v120
    %v382 = vunpack.c.l.b16 %v121
    %v383 = vunpack.c.l.b16 %v122
    %v384 = vunpack.c.l.b16 %v123
    %v385 = vunpack.c.l.b16 %v124
    %v386 = vunpack.c.l.b16 %v125
    %v387 = vunpack.c.l.b16 %v126
    %v388 = vunpack.c.l.b16 %v127
    %v389 = vunpack.c.l.b16 %v128
    %v390 = vunpack.c.l.b16 %v129
    %v391 = vunpack.c.l.b16 %v130
    %v392 = vunpack.c.l.b16 %v131
    %v393 = vunpack.c.l.b16 %v132
    %v394 = vunpack.c.l.b16 %v133
    %v395 = vunpack.c.l.b16 %v134
    %v396 = vunpack.c.l.b16 %v135
    %v397 = vunpack.c.l.b16 %v136
    %v398 = vunpack.c.l.b16 %v137
    %v399 = vunpack.c.l.b16 %v138
    %v400 = vunpack.c.l.b16 %v139
    %v401 = vunpack.c.l.b16 %v140
    %v402 = vunpack.c.l.b16 %v141
    %v403 = vunpack.c.l.b16 %v142
    %v404 = vunpack.c.l.b16 %v143
    %v405 = vunpack.c.l.b16 %v144
    %v406 = vunpack.c.l.b16 %v145
    %v407 = vunpack.c.l.b16 %v146
    %v408 = vunpack.c.l.b16 %v147
    %v409 = vunpack.c.l.b16 %v148
    %v410 = vunpack.c.l.b16 %v149
    %v411 = vunpack.c.l.b16 %v150
    %v412 = vunpack.c.l.b16 %v151
    %v413 = vunpack.c.l.b16 %v152
    %v414 = vunpack.c.l.b16 %v153
    %v415 = vunpack.c.l.b16 %v154
    %v416 = vunpack.c.l.b16 %v155
    %v417 = vunpack.c.l.b16 %v156
    %v418 = vunpack.c.l.b16 %v157
    %v419 = vunpack.c.l.b16 %v158
    %v420 = vunpack.c.l.b16 %v159
    %v421 = vunpack.c.l.b16 %v160
    %v422 = vunpack.c.l.b16 %v161
    %v423 = vunpack.c.l.b16 %v162
    %v424 = vunpack.c.l.b16 %v163
    %v425 = vunpack.c.l.b16 %v164
    %v426 = vunpack.c.l.b16 %v165
    %v427 = vunpack.c.l.b16 %v166
    %v428 = vunpack.c.l.b16 %v167
    %v429 = vunpack.c.l.b16 %v168
    %v430 = vunpack.c.l.b16 %v169
    %v431 = vunpack.c.l.b16 %v170
    %v432 = vunpack.c.l.b16 %v171
    %v433 = vunpack.c.l.b16 %v172
    %v434 = vunpack.c.l.b16 %v173
    %v435 = vunpack.c.l.b16 %v174
    %v436 = vunpack.c.l.b16 %v175
    %v437 = vunpack.c.l.b16 %v176
    %v438 = vunpack.c.l.b16 %v177
    %v439 = vunpack.c.l.b16 %v178
    %v440 = vunpack.c.l.b16 %v179
    %v441 = vunpack.c.l.b16 %v180
    %v442 = vunpack.c.l.b16 %v181
    %v443 = vunpack.c.l.b16 %v182
    %v444 = vunpack.c.l.b16 %v183
    %v445 = vunpack.c.l.b16 %v184
    %v446 = vunpack.c.l.b16 %v185
    %v447 = vunpack.c.l.b16 %v186
    %v448 = vunpack.c.l.b16 %v187
    %v449 = vunpack.c.l.b16 %v188
    %v450 = vunpack.c.l.b16 %v189
    %v451 = vunpack.c.l.b16 %v190
    %v452 = vunpack.c.l.b16 %v191
    %v453 = vunpack.c.l.b16 %v192
    %v454 = vunpack.c.l.b16 %v193
    %v455 = vunpack.c.l.b16 %v194
    %v456 = vunpack.c.l.b16 %v195
    %v457 = vunpack.c.l.b16 %v196
    %v458 = vunpack.c.l.b16 %v197
    %v459 = vunpack.c.l.b16 %v198
    %v460 = vunpack.c.l.b16 %v199
    %v461 = vunpack.c.l.b16 %v200
    %v462 = vunpack.c.l.b16 %v201
    %v463 = vunpack.c.l.b16 %v202
    %v464 = vunpack.c.l.b16 %v203
    %v465 = vunpack.c.l.b16 %v204
    %v466 = vunpack.c.l.b16 %v205
    %v467 = vunpack.c.l.b16 %v206
    %v468 = vunpack.c.l.b16 %v207
    %v469 = vunpack.c.l.b16 %v208
    %v470 = vunpack.c.l.b16 %v209
    %v471 = vunpack.c.l.b16 %v210
    %v472 = vunpack.c.l.b16 %v211
    %v473 = vunpack.c.l.b16 %v212
    %v474 = vunpack.c.l.b16 %v213
    %v475 = vunpack.c.l.b16 %v214
    %v476 = vpack.c.b16 %v349, %v348
    %v477 = vpack.c.b16 %v351, %v350
    %v478 = vpack.c.b16 %v353, %v352
    %v479 = vpack.c.b16 %v355, %v354
    %v480 = vpack.c.b16 %v357, %v356
    %v481 = vpack.c.b16 %v359, %v358
    %v482 = vpack.c.b16 %v361, %v360
    %v483 = vpack.c.b16 %v363, %v362
    %v484 = vpack.c.b16 %v365, %v364
    %v485 = vpack.c.b16 %v367, %v366
    %v486 = vpack.c.b16 %v369, %v368
    %v487 = vpack.c.b16 %v371, %v370
    %v488 = vpack.c.b16 %v373, %v372
    %v489 = vpack.c.b16 %v375, %v374
    %v490 = vpack.c.b16 %v377, %v376
    %v491 = vpack.c.b16 %v379, %v378
    %v492 = vpack.c.b16 %v381, %v380
    %v493 = vpack.c.b16 %v383, %v382
    %v494 = vpack.c.b16 %v385, %v384
    %v495 = vpack.c.b16 %v387, %v386
    %v496 = vpack.c.b16 %v389, %v388
    %v497 = vpack.c.b16 %v391, %v390
    %v498 = vpack.c.b16 %v393, %v392
    %v499 = vpack.c.b16 %v395, %v394
    %v500 = vpack.c.b16 %v397, %v396
    %v501 = vpack.c.b16 %v399, %v398
    %v502 = vpack.c.b16 %v401, %v400
    %v503 = vpack.c.b16 %v403, %v402
    %v504 = vpack.c.b16 %v405, %v404
    %v505 = vpack.c.b16 %v407, %v406
    %v506 = vpack.c.b16 %v409, %v408
    %v507 = vpack.c.b16 %v411, %v410
    %v508 = vpack.c.b16 %v413, %v412
    %v509 = vpack.c.b16 %v415, %v414
    %v510 = vpack.c.b16 %v417, %v416
    %v511 = vpack.c.b16 %v419, %v418
    %v512 = vpack.c.b16 %v421, %v420
    %v513 = vpack.c.b16 %v423, %v422
    %v514 = vpack.c.b16 %v425, %v424
    %v515 = vpack.c.b16 %v427, %v426
    %v516 = vpack.c.b16 %v429, %v428
    %v517 = vpack.c.b16 %v431, %v430
    %v518 = vpack.c.b16 %v433, %v432
    %v519 = vpack.c.b16 %v435, %v434
    %v520 = vpack.c.b16 %v437, %v436
    %v521 = vpack.c.b16 %v439, %v438
    %v522 = vpack.c.b16 %v441, %v440
    %v523 = vpack.c.b16 %v443, %v442
    %v524 = vpack.c.b16 %v445, %v444
    %v525 = vpack.c.b16 %v447, %v446
    %v526 = vpack.c.b16 %v449, %v448
    %v527 = vpack.c.b16 %v451, %v450
    %v528 = vpack.c.b16 %v453, %v452
    %v529 = vpack.c.b16 %v455, %v454
    %v530 = vpack.c.b16 %v457, %v456
    %v531 = vpack.c.b16 %v459, %v458
    %v532 = vpack.c.b16 %v461, %v460
    %v533 = vpack.c.b16 %v463, %v462
    %v534 = vpack.c.b16 %v465, %v464
    %v535 = vpack.c.b16 %v467, %v466
    %v536 = vpack.c.b16 %v469, %v468
    %v537 = vpack.c.b16 %v471, %v470
    %v538 = vpack.c.b16 %v473, %v472
    %v539 = vpack.c.b16 %v475, %v474
    %604 = vmatprep.subr.bf16.mxu0 0
    %605 = vmatpush1.bf16.msra.mxu0 %v483
    %606 = vmatprep.subr.bf16.mxu0 0
    %607 = vmatpush1.bf16.msra.mxu0 %v482
    %608 = vmatprep.subr.bf16.mxu0 0
    %609 = vmatpush1.bf16.msra.mxu0 %v481
    %610 = vmatprep.subr.bf16.mxu0 0
    %611 = vmatpush1.bf16.msra.mxu0 %v480
    %612 = vmatprep.subr.bf16.mxu0 0
    %613 = vmatpush1.bf16.msra.mxu0 %v479
    %614 = vmatprep.subr.bf16.mxu0 0
    %615 = vmatpush1.bf16.msra.mxu0 %v478
    %616 = vmatprep.subr.bf16.mxu0 0
    %617 = vmatpush1.bf16.msra.mxu0 %v477
    %618 = vmatprep.subr.bf16.mxu0 0
    %619 = vmatpush1.bf16.msra.mxu0 %v476
    %620 = vmatprep.subr.bf16.mxu0 0
    %621 = vmatpush2.bf16.msra.mxu0 %v491
    %622 = vmatprep.subr.bf16.mxu0 0
    %623 = vmatpush2.bf16.msra.mxu0 %v490
    %624 = vmatprep.subr.bf16.mxu0 0
    %625 = vmatpush2.bf16.msra.mxu0 %v489
    %626 = vmatprep.subr.bf16.mxu0 0
    %627 = vmatpush2.bf16.msra.mxu0 %v488
    %628 = vmatprep.subr.bf16.mxu0 0
    %629 = vmatpush2.bf16.msra.mxu0 %v487
    %630 = vmatprep.subr.bf16.mxu0 0
    %631 = vmatpush2.bf16.msra.mxu0 %v486
    %632 = vmatprep.subr.bf16.mxu0 0
    %633 = vmatpush2.bf16.msra.mxu0 %v485
    %634 = vmatprep.subr.bf16.mxu0 0
    %635 = vmatpush2.bf16.msra.mxu0 %v484
    %636 = vmatprep.mubr.bf16.mxu0 %v80
    %637 = vmatmul.mubr.bf16.gmra.mxu0 %v79
    %v638 = vpop.f32.mrf.mxu0
    %v639 = vadd.f32 %v219, %v638
    %v640 = vpop.f32.mrf.mxu0
    %v641 = vpop.f32.mrf.mxu0
    %v642 = vpop.f32.mrf.mxu0
    %643 = vdwg.mxu0
    %644 = vmatprep.subr.bf16.mxu0 0
    %645 = vmatpush1.bf16.msra.mxu0 %v499
    %646 = vmatprep.subr.bf16.mxu0 0
    %647 = vmatpush1.bf16.msra.mxu0 %v498
    %648 = vmatprep.subr.bf16.mxu0 0
    %649 = vmatpush1.bf16.msra.mxu0 %v497
    %650 = vmatprep.subr.bf16.mxu0 0
    %651 = vmatpush1.bf16.msra.mxu0 %v496
    %652 = vmatprep.subr.bf16.mxu0 0
    %653 = vmatpush1.bf16.msra.mxu0 %v495
    %654 = vmatprep.subr.bf16.mxu0 0
    %655 = vmatpush1.bf16.msra.mxu0 %v494
    %656 = vmatprep.subr.bf16.mxu0 0
    %657 = vmatpush1.bf16.msra.mxu0 %v493
    %658 = vmatprep.subr.bf16.mxu0 0
    %659 = vmatpush1.bf16.msra.mxu0 %v492
    %660 = vmatprep.subr.bf16.mxu0 0
    %661 = vmatpush2.bf16.msra.mxu0 %v507
    %662 = vmatprep.subr.bf16.mxu0 0
    %663 = vmatpush2.bf16.msra.mxu0 %v506
    %664 = vmatprep.subr.bf16.mxu0 0
    %665 = vmatpush2.bf16.msra.mxu0 %v505
    %666 = vmatprep.subr.bf16.mxu0 0
    %667 = vmatpush2.bf16.msra.mxu0 %v504
    %668 = vmatprep.subr.bf16.mxu0 0
    %669 = vmatpush2.bf16.msra.mxu0 %v503
    %670 = vmatprep.subr.bf16.mxu0 0
    %671 = vmatpush2.bf16.msra.mxu0 %v502
    %672 = vmatprep.subr.bf16.mxu0 0
    %673 = vmatpush2.bf16.msra.mxu0 %v501
    %674 = vmatprep.subr.bf16.mxu0 0
    %675 = vmatpush2.bf16.msra.mxu0 %v500
    %676 = vmatprep.mubr.bf16.mxu0 %v82
    %677 = vmatmul.mubr.bf16.gmra.mxu0 %v81
    %v678 = vpop.f32.mrf.mxu0
    %v679 = vadd.f32 %v639, %v678
    %v680 = vpop.f32.mrf.mxu0
    %v681 = vpop.f32.mrf.mxu0
    %v682 = vpop.f32.mrf.mxu0
    %683 = vdwg.mxu0
    %684 = vmatprep.subr.bf16.mxu0 0
    %685 = vmatpush1.bf16.msra.mxu0 %v515
    %686 = vmatprep.subr.bf16.mxu0 0
    %687 = vmatpush1.bf16.msra.mxu0 %v514
    %688 = vmatprep.subr.bf16.mxu0 0
    %689 = vmatpush1.bf16.msra.mxu0 %v513
    %690 = vmatprep.subr.bf16.mxu0 0
    %691 = vmatpush1.bf16.msra.mxu0 %v512
    %692 = vmatprep.subr.bf16.mxu0 0
    %693 = vmatpush1.bf16.msra.mxu0 %v511
    %694 = vmatprep.subr.bf16.mxu0 0
    %695 = vmatpush1.bf16.msra.mxu0 %v510
    %696 = vmatprep.subr.bf16.mxu0 0
    %697 = vmatpush1.bf16.msra.mxu0 %v509
    %698 = vmatprep.subr.bf16.mxu0 0
    %699 = vmatpush1.bf16.msra.mxu0 %v508
    %700 = vmatprep.subr.bf16.mxu0 0
    %701 = vmatpush2.bf16.msra.mxu0 %v523
    %702 = vmatprep.subr.bf16.mxu0 0
    %703 = vmatpush2.bf16.msra.mxu0 %v522
    %704 = vmatprep.subr.bf16.mxu0 0
    %705 = vmatpush2.bf16.msra.mxu0 %v521
    %706 = vmatprep.subr.bf16.mxu0 0
    %707 = vmatpush2.bf16.msra.mxu0 %v520
    %708 = vmatprep.subr.bf16.mxu0 0
    %709 = vmatpush2.bf16.msra.mxu0 %v519
    %710 = vmatprep.subr.bf16.mxu0 0
    %711 = vmatpush2.bf16.msra.mxu0 %v518
    %712 = vmatprep.subr.bf16.mxu0 0
    %713 = vmatpush2.bf16.msra.mxu0 %v517
    %714 = vmatprep.subr.bf16.mxu0 0
    %715 = vmatpush2.bf16.msra.mxu0 %v516
    %716 = vmatprep.mubr.bf16.mxu0 %v84
    %717 = vmatmul.mubr.bf16.gmra.mxu0 %v83
    %v718 = vpop.f32.mrf.mxu0
    %v719 = vadd.f32 %v679, %v718
    %v720 = vpop.f32.mrf.mxu0
    %v721 = vpop.f32.mrf.mxu0
    %v722 = vpop.f32.mrf.mxu0
    %723 = vdwg.mxu0
    %724 = vmatprep.subr.bf16.mxu0 0
    %725 = vmatpush1.bf16.msra.mxu0 %v531
    %726 = vmatprep.subr.bf16.mxu0 0
    %727 = vmatpush1.bf16.msra.mxu0 %v530
    %728 = vmatprep.subr.bf16.mxu0 0
    %729 = vmatpush1.bf16.msra.mxu0 %v529
    %730 = vmatprep.subr.bf16.mxu0 0
    %731 = vmatpush1.bf16.msra.mxu0 %v528
    %732 = vmatprep.subr.bf16.mxu0 0
    %733 = vmatpush1.bf16.msra.mxu0 %v527
    %734 = vmatprep.subr.bf16.mxu0 0
    %735 = vmatpush1.bf16.msra.mxu0 %v526
    %736 = vmatprep.subr.bf16.mxu0 0
    %737 = vmatpush1.bf16.msra.mxu0 %v525
    %738 = vmatprep.subr.bf16.mxu0 0
    %739 = vmatpush1.bf16.msra.mxu0 %v524
    %740 = vmatprep.subr.bf16.mxu0 0
    %741 = vmatpush2.bf16.msra.mxu0 %v539
    %742 = vmatprep.subr.bf16.mxu0 0
    %743 = vmatpush2.bf16.msra.mxu0 %v538
    %744 = vmatprep.subr.bf16.mxu0 0
    %745 = vmatpush2.bf16.msra.mxu0 %v537
    %746 = vmatprep.subr.bf16.mxu0 0
    %747 = vmatpush2.bf16.msra.mxu0 %v536
    %748 = vmatprep.subr.bf16.mxu0 0
    %749 = vmatpush2.bf16.msra.mxu0 %v535
    %750 = vmatprep.subr.bf16.mxu0 0
    %751 = vmatpush2.bf16.msra.mxu0 %v534
    %752 = vmatprep.subr.bf16.mxu0 0
    %753 = vmatpush2.bf16.msra.mxu0 %v533
    %754 = vmatprep.subr.bf16.mxu0 0
    %755 = vmatpush2.bf16.msra.mxu0 %v532
    %756 = vmatprep.mubr.bf16.mxu0 %v86
    %757 = vmatmul.mubr.bf16.gmra.mxu0 %v85
    %v758 = vpop.f32.mrf.mxu0
    %v759 = vadd.f32 %v719, %v758
    %v760 = vpop.f32.mrf.mxu0
    %v761 = vpop.f32.mrf.mxu0
    %v762 = vpop.f32.mrf.mxu0
    %763 = vdwg.mxu0
    %v764 = vmax.f32 %v759, 0.0
    %v765 = vpack.c.bf16 %v764, %v764
    %v766 = vld [vmem:[%s2] sm:$0xf]
    %v767 = vld [vmem:[%s2 + $0x4] sm:$0xf]
    %v768 = vld [vmem:[%s2 + $0x8] sm:$0xf]
    %v769 = vld [vmem:[%s2 + $0xc] sm:$0xf]
    %v770 = vld [vmem:[%s2 + $0x10] sm:$0xf]
    %v771 = vld [vmem:[%s2 + $0x14] sm:$0xf]
    %v772 = vld [vmem:[%s2 + $0x18] sm:$0xf]
    %v773 = vld [vmem:[%s2 + $0x1c] sm:$0xf]
    %v774 = vld [vmem:[%s2 + $0x20] sm:$0xf]
    %v775 = vld [vmem:[%s2 + $0x24] sm:$0xf]
    %v776 = vld [vmem:[%s2 + $0x28] sm:$0xf]
    %v777 = vld [vmem:[%s2 + $0x2c] sm:$0xf]
    %v778 = vld [vmem:[%s2 + $0x30] sm:$0xf]
    %v779 = vld [vmem:[%s2 + $0x34] sm:$0xf]
    %v780 = vld [vmem:[%s2 + $0x38] sm:$0xf]
    %v781 = vld [vmem:[%s2 + $0x3c] sm:$0xf]
    %v782 = vld [vmem:[%s3 + $0x1] sm:$0x1]
    %v783 = vlaneseq
    %v784 = vshrl.u32 %v783, 7
    %v785 = vsub.s32 0, %v784
    %v786 = vrot.slane %v782, %v785
    %v803 = vunpack.c.l.b16 %v766
    %v804 = vunpack.c.l.b16 %v767
    %v805 = vunpack.c.l.b16 %v768
    %v806 = vunpack.c.l.b16 %v769
    %v807 = vunpack.c.l.b16 %v770
    %v808 = vunpack.c.l.b16 %v771
    %v809 = vunpack.c.l.b16 %v772
    %v810 = vunpack.c.l.b16 %v773
    %v811 = vunpack.c.l.b16 %v774
    %v812 = vunpack.c.l.b16 %v775
    %v813 = vunpack.c.l.b16 %v776
    %v814 = vunpack.c.l.b16 %v777
    %v815 = vunpack.c.l.b16 %v778
    %v816 = vunpack.c.l.b16 %v779
    %v817 = vunpack.c.l.b16 %v780
    %v818 = vunpack.c.l.b16 %v781
    %v819 = vpack.c.b16 %v804, %v803
    %v820 = vpack.c.b16 %v806, %v805
    %v821 = vpack.c.b16 %v808, %v807
    %v822 = vpack.c.b16 %v810, %v809
    %v823 = vpack.c.b16 %v812, %v811
    %v824 = vpack.c.b16 %v814, %v813
    %v825 = vpack.c.b16 %v816, %v815
    %v826 = vpack.c.b16 %v818, %v817
    %835 = vmatprep.subr.bf16.mxu0 0
    %836 = vmatpush1.bf16.msra.mxu0 %v826
    %837 = vmatprep.subr.bf16.mxu0 0
    %838 = vmatpush1.bf16.msra.mxu0 %v825
    %839 = vmatprep.subr.bf16.mxu0 0
    %840 = vmatpush1.bf16.msra.mxu0 %v824
    %841 = vmatprep.subr.bf16.mxu0 0
    %842 = vmatpush1.bf16.msra.mxu0 %v823
    %843 = vmatprep.subr.bf16.mxu0 0
    %844 = vmatpush1.bf16.msra.mxu0 %v822
    %845 = vmatprep.subr.bf16.mxu0 0
    %846 = vmatpush1.bf16.msra.mxu0 %v821
    %847 = vmatprep.subr.bf16.mxu0 0
    %848 = vmatpush1.bf16.msra.mxu0 %v820
    %849 = vmatprep.subr.bf16.mxu0 0
    %850 = vmatpush1.bf16.msra.mxu0 %v819
    %851 = vmatprep.subr.bf16.mxu0 0
    %852 = vmatpush2.bf16.msra.mxu0 0
    %853 = vmatprep.subr.bf16.mxu0 0
    %854 = vmatpush2.bf16.msra.mxu0 0
    %855 = vmatprep.subr.bf16.mxu0 0
    %856 = vmatpush2.bf16.msra.mxu0 0
    %857 = vmatprep.subr.bf16.mxu0 0
    %858 = vmatpush2.bf16.msra.mxu0 0
    %859 = vmatprep.subr.bf16.mxu0 0
    %860 = vmatpush2.bf16.msra.mxu0 0
    %861 = vmatprep.subr.bf16.mxu0 0
    %862 = vmatpush2.bf16.msra.mxu0 0
    %863 = vmatprep.subr.bf16.mxu0 0
    %864 = vmatpush2.bf16.msra.mxu0 0
    %865 = vmatprep.subr.bf16.mxu0 0
    %866 = vmatpush2.bf16.msra.mxu0 0
    %867 = vmatprep.mubr.bf16.mxu0 0
    %868 = vmatmul.mubr.bf16.gmra.mxu0 %v765
    %v869 = vpop.f32.mrf.mxu0
    %v870 = vadd.f32 %v786, %v869
    %v871 = vpop.f32.mrf.mxu0
    %v872 = vpop.f32.mrf.mxu0
    %v873 = vpop.f32.mrf.mxu0
    %874 = vdwg.mxu0
    %875 = vst [vmem:[#allocation5] sm:$0x3] %v870
    // Predicated region
    $region22: #{server_model_forward.1} parent=1 // pred_check
      _
    $region23: #{server_model_forward.1} parent=1 // pred_check_branch
      %877 = sbr.rel (0) target = $region25
    $region24: #{server_model_forward.1} parent=1 // pred_region
      %s879 = ssub.s32 32, 32
      %880 = vsyncadd [#allocation4], %s879
      %s882 = sshll.u32 [#allocation5], 4
      %s883 = int_to_ptr.vmem [resolvable:$true] %s882
      %885 = dma.vmem_to_hbm [thread:$0]  %s883, 32, %s4, [#allocation4]
    $region25: #{server_model_forward.1} parent=1 // pred_fallthru
      _
    // Predicated region
    $region26: #{server_model_forward.1} parent=1 // pred_check
      _
    $region27: #{server_model_forward.1} parent=1 // pred_check_branch
      %887 = sbr.rel (0) target = $region29
    $region28: #{server_model_forward.1} parent=1 // pred_region
      %888 = dma.done [#allocation4], 32
    $region29: #{server_model_forward.1} parent=1 // pred_fallthru
      _
    %889 = vsyncpa [#allocation3], 1
    %890 = vsyncpa [#allocation4], 1

</llo_original>
